<compile_context>
chip_gen: v7x
topology: tpu7x:2x2x1
jax: 0.10.0
libtpu: 0.0.40
codegen_flags: <defaults>
</compile_context>

<pallas_src>
import numpy as np
import jax
import jax.numpy as jnp
from jax.experimental import pallas as pl
from jax.experimental.pallas import tpu as pltpu


def _round_up(n, m):
    return ((n + m - 1) // m) * m


def _leaky_relu(x, slope=0.2):
    return jnp.where(x > 0, x, slope * x)


def discriminator_kernel(x_ref, w1_ref, b1_ref, w2_ref, b2_ref, w3_ref, b3_ref,
                         out_ref):
    """One batch tile of the 3-layer MLP.

    x_ref : (TB, F)    f32   flattened image tile (cast to bf16 in-kernel)
    w1_ref: (F, 512)   bf16  b1_ref: (1, 512) f32
    w2_ref: (512, 256) bf16  b2_ref: (1, 256) f32
    w3_ref: (1, 256)   f32   b3_ref: (1, 1)   f32   (SMEM scalar)
    out_ref: (1, 1, TB) f32  lane-dense output row
    """
    # Layer 1: bf16 MXU matmul with f32 accumulation; bias + LeakyReLU in f32.
    x = x_ref[...].astype(jnp.bfloat16)
    h = jnp.dot(x, w1_ref[...], preferred_element_type=jnp.float32)
    h = _leaky_relu(h + b1_ref[...])

    # Layer 2.
    h = jnp.dot(h.astype(jnp.bfloat16), w2_ref[...],
                preferred_element_type=jnp.float32)
    h = _leaky_relu(h + b2_ref[...])

    # Layer 3 (256 -> 1): VPU multiply + lane reduction instead of an N=1 MXU
    # matmul.  Result is stored as a lane-dense (1, 1, TB) row so the output
    # store is contiguous/unmasked rather than per-sublane vst.msk.
    logits = jnp.sum(h * w3_ref[...], axis=-1) + b3_ref[0, 0]
    out_ref[...] = logits[None, None, :].astype(out_ref.dtype)


def init_discriminator_params(input_shape, key):
    """Deterministic init mimicking torch.nn.Linear default U(-1/sqrt(fan_in), +)."""
    f_in = int(np.prod(input_shape))
    dims = [(f_in, 512), (512, 256), (256, 1)]
    params = []
    for (fan_in, fan_out) in dims:
        key, kw, kb = jax.random.split(key, 3)
        bound = 1.0 / np.sqrt(fan_in)
        w = jax.random.uniform(kw, (fan_in, fan_out), jnp.float32, -bound, bound)
        b = jax.random.uniform(kb, (1, fan_out), jnp.float32, -bound, bound)
        params.extend([w, b])
    return params  # [w1, b1, w2, b2, w3, b3]


def discriminator_forward(img, params, *, batch_tile=512):
    """img: (B, C, H, W) float32  ->  validity: (B, 1) float32."""
    w1, b1, w2, b2, w3, b3 = params
    B = img.shape[0]
    F = int(np.prod(img.shape[1:]))

    # Flatten only (contiguous reshape -> no extra HBM pass); x stays f32 in
    # HBM and is cast to bf16 inside the kernel, so it is read exactly once.
    x = img.reshape(B, F)

    # Batch tile: multiple of 16 (bf16 sublane packing), capped so the grid has
    # >= 4 steps whenever B allows it (v7x megacore split + DMA/compute overlap).
    tb_req = _round_up(max(int(batch_tile), 16), 16)
    tb_cap = max(16, _round_up(pl.cdiv(B, 4), 16))
    tb = min(tb_req, tb_cap)
    Bp = _round_up(B, tb)
    if Bp != B:                         # pad the batch only when needed
        x = jnp.pad(x, ((0, Bp - B), (0, 0)))
    num_tiles = Bp // tb

    # Weights are resident across grid steps: one-time bf16 cast in the wrapper.
    # Biases and the final 256->1 reduction stay f32.
    w1_bf16 = w1.reshape(F, 512).astype(jnp.bfloat16)
    w2_bf16 = w2.reshape(512, 256).astype(jnp.bfloat16)
    b1_r = b1.reshape(1, 512).astype(jnp.float32)
    b2_r = b2.reshape(1, 256).astype(jnp.float32)
    w3_r = w3.reshape(1, 256).astype(jnp.float32)   # row layout for VPU reduce
    b3_r = b3.reshape(1, 1).astype(jnp.float32)

    def resident(shape):  # constant index_map -> stays in VMEM, no re-DMA
        return pl.BlockSpec(shape, lambda i: (0, 0))

    in_specs = [
        pl.BlockSpec((tb, F), lambda i: (i, 0)),        # x tile (pipelined)
        resident((F, 512)), resident((1, 512)),
        resident((512, 256)), resident((1, 256)),
        resident((1, 256)),
        pl.BlockSpec(memory_space=pltpu.SMEM),          # b3 scalar in SMEM
    ]
    # Lane-dense output: one (1, 1, tb) row per grid step.
    out_specs = pl.BlockSpec((1, 1, tb), lambda i: (i, 0, 0))

    # VMEM budget: (double-buffered) resident weights + double-buffered f32
    # x/out tiles + f32 activations, plus headroom; capped at 48 MiB (< v7x's
    # 64 MiB physical VMEM), floored at 16 MiB.
    weight_bytes = 2 * (F * 512 * 2 + 512 * 256 * 2) + 2 * (512 + 256 + 256) * 4
    tile_bytes = 2 * tb * F * 4 + 2 * tb * 4
    act_bytes = 2 * tb * (512 + 256) * 4
    vmem_limit = weight_bytes + tile_bytes + act_bytes + (4 << 20)
    vmem_limit = int(min(48 * 2**20, max(vmem_limit, 16 * 2**20)))

    flops = 2 * Bp * (F * 512 + 512 * 256 + 256)
    bytes_accessed = (Bp * F * 4 + F * 512 * 2 + 512 * 256 * 2
                      + (512 + 256 + 256 + 1) * 4 + Bp * 4)

    out = pl.pallas_call(
        discriminator_kernel,
        out_shape=jax.ShapeDtypeStruct((num_tiles, 1, tb), jnp.float32),
        grid=(num_tiles,),
        in_specs=in_specs,
        out_specs=out_specs,
        compiler_params=pltpu.CompilerParams(
            dimension_semantics=("parallel",),   # batch axis -> both TCs on v7x
            vmem_limit_bytes=vmem_limit,
        ),
        cost_estimate=pl.CostEstimate(
            flops=int(flops), transcendentals=0,
            bytes_accessed=int(bytes_accessed)),
    )(x, w1_bf16, b1_r, w2_bf16, b2_r, w3_r, b3_r)

    return out.reshape(Bp)[:B].reshape(B, 1)


def discriminator_ref(img, params, *, bf16_matmul=False):
    """Pure-JAX reference. bf16_matmul=True mirrors the kernel's MXU dtypes."""
    w1, b1, w2, b2, w3, b3 = params
    x = img.reshape(img.shape[0], -1).astype(jnp.float32)
    b1 = b1.reshape(1, -1); b2 = b2.reshape(1, -1); b3 = b3.reshape(1, -1)
    if bf16_matmul:
        h = jnp.dot(x.astype(jnp.bfloat16), w1.astype(jnp.bfloat16),
                    preferred_element_type=jnp.float32) + b1
        h = jnp.where(h > 0, h, 0.2 * h)
        h = jnp.dot(h.astype(jnp.bfloat16), w2.astype(jnp.bfloat16),
                    preferred_element_type=jnp.float32) + b2
        h = jnp.where(h > 0, h, 0.2 * h)
    else:
        h = x @ w1 + b1
        h = jnp.where(h > 0, h, 0.2 * h)
        h = h @ w2 + b2
        h = jnp.where(h > 0, h, 0.2 * h)
    return h @ w3 + b3


if __name__ == "__main__":
    key = jax.random.PRNGKey(0)
    k_img, k_params = jax.random.split(key)

    # Small shapes consistent with the module: input_shape = (C, H, W).
    input_shape = (1, 16, 16)   # prod = 256 features
    batch = 48                  # tb=16 -> 3-step pipelined grid

    img = jax.random.normal(k_img, (batch,) + input_shape, dtype=jnp.float32)
    params = init_discriminator_params(input_shape, k_params)

    out = discriminator_forward(img, params)
    out = jax.block_until_ready(out)
    assert out.shape == (batch, 1)

    # Exact-path check: reference with the same bf16 MXU / f32-accum dtypes.
    ref_bf16 = discriminator_ref(img, params, bf16_matmul=True)
    np.testing.assert_allclose(np.asarray(out), np.asarray(ref_bf16),
                               rtol=2e-3, atol=2e-3)

    # Semantic check vs the full-f32 PyTorch-style forward (bf16 rounding tol).
    ref_f32 = discriminator_ref(img, params, bf16_matmul=False)
    np.testing.assert_allclose(np.asarray(out), np.asarray(ref_f32),
                               rtol=5e-2, atol=5e-2)

    print("KERNEL_OK")
</pallas_src>

<mosaic_0001>
module attributes {stable_mosaic.version = 11 : i64} {
  func.func @discriminator_kernel(%arg0: i32, %arg1: memref<16x256xf32, #tpu.memory_space<vmem>>, %arg2: memref<256x512xbf16, #tpu.memory_space<vmem>>, %arg3: memref<1x512xf32, #tpu.memory_space<vmem>>, %arg4: memref<512x256xbf16, #tpu.memory_space<vmem>>, %arg5: memref<1x256xf32, #tpu.memory_space<vmem>>, %arg6: memref<1x256xf32, #tpu.memory_space<vmem>>, %arg7: memref<1x1xf32, #tpu.memory_space<smem>>, %arg8: memref<1x1x16xf32, #tpu.memory_space<vmem>>) attributes {dimension_semantics = [#tpu.dimension_semantics<parallel>], iteration_bounds = array<i64: 3>, scalar_prefetch = 0 : i64, scratch_operands = 0 : i64, tpu.core_type = #tpu.core_type<tc>, window_params = [{transform_indices = @transform_0, window_bounds = array<i64: 16, 256>}, {pipeline_mode = #tpu.pipeline_mode<synchronous>, transform_indices = @transform_1, window_bounds = array<i64: 256, 512>}, {pipeline_mode = #tpu.pipeline_mode<synchronous>, transform_indices = @transform_2, window_bounds = array<i64: 1, 512>}, {pipeline_mode = #tpu.pipeline_mode<synchronous>, transform_indices = @transform_3, window_bounds = array<i64: 512, 256>}, {pipeline_mode = #tpu.pipeline_mode<synchronous>, transform_indices = @transform_4, window_bounds = array<i64: 1, 256>}, {pipeline_mode = #tpu.pipeline_mode<synchronous>, transform_indices = @transform_5, window_bounds = array<i64: 1, 256>}, {transform_indices = @transform_6, window_bounds = array<i64: 1, 1>}, {transform_indices = @transform_7, window_bounds = array<i64: 1, 1, 16>}]} {
    %c0 = arith.constant 0 : index
    %c0_0 = arith.constant 0 : index
    %0 = vector.load %arg1[%c0, %c0_0] : memref<16x256xf32, #tpu.memory_space<vmem>>, vector<16x256xf32>
    %1 = arith.truncf %0 : vector<16x256xf32> to vector<16x256xbf16>
    %c0_1 = arith.constant 0 : index
    %c0_2 = arith.constant 0 : index
    %2 = vector.load %arg2[%c0_1, %c0_2] : memref<256x512xbf16, #tpu.memory_space<vmem>>, vector<256x512xbf16>
    %cst = arith.constant dense<0.000000e+00> : vector<16x512xf32>
    %3 = tpu.matmul %1, %2, %cst {dimension_numbers = #tpu.dot_dimension_numbers<[1], [0], [0], [1], [0, 0, 1, 1], [], []>} : vector<16x256xbf16>, vector<256x512xbf16>, vector<16x512xf32> -> vector<16x512xf32>
    %c0_3 = arith.constant 0 : index
    %c0_4 = arith.constant 0 : index
    %4 = vector.load %arg3[%c0_3, %c0_4] : memref<1x512xf32, #tpu.memory_space<vmem>>, vector<1x512xf32>
    %5 = vector.broadcast %4 : vector<1x512xf32> to vector<16x512xf32>
    %6 = arith.addf %3, %5 : vector<16x512xf32>
    %cst_5 = arith.constant 0.000000e+00 : f32
    %7 = vector.broadcast %cst_5 : f32 to vector<16x512xf32>
    %8 = arith.cmpf ogt, %6, %7 : vector<16x512xf32>
    %cst_6 = arith.constant 2.000000e-01 : f32
    %9 = vector.broadcast %cst_6 : f32 to vector<16x512xf32>
    %10 = arith.mulf %9, %6 : vector<16x512xf32>
    %11 = arith.select %8, %6, %10 : vector<16x512xi1>, vector<16x512xf32>
    %12 = arith.truncf %11 : vector<16x512xf32> to vector<16x512xbf16>
    %c0_7 = arith.constant 0 : index
    %c0_8 = arith.constant 0 : index
    %13 = vector.load %arg4[%c0_7, %c0_8] : memref<512x256xbf16, #tpu.memory_space<vmem>>, vector<512x256xbf16>
    %cst_9 = arith.constant dense<0.000000e+00> : vector<16x256xf32>
    %14 = tpu.matmul %12, %13, %cst_9 {dimension_numbers = #tpu.dot_dimension_numbers<[1], [0], [0], [1], [0, 0, 1, 1], [], []>} : vector<16x512xbf16>, vector<512x256xbf16>, vector<16x256xf32> -> vector<16x256xf32>
    %c0_10 = arith.constant 0 : index
    %c0_11 = arith.constant 0 : index
    %15 = vector.load %arg5[%c0_10, %c0_11] : memref<1x256xf32, #tpu.memory_space<vmem>>, vector<1x256xf32>
    %16 = vector.broadcast %15 : vector<1x256xf32> to vector<16x256xf32>
    %17 = arith.addf %14, %16 : vector<16x256xf32>
    %cst_12 = arith.constant 0.000000e+00 : f32
    %18 = vector.broadcast %cst_12 : f32 to vector<16x256xf32>
    %19 = arith.cmpf ogt, %17, %18 : vector<16x256xf32>
    %cst_13 = arith.constant 2.000000e-01 : f32
    %20 = vector.broadcast %cst_13 : f32 to vector<16x256xf32>
    %21 = arith.mulf %20, %17 : vector<16x256xf32>
    %22 = arith.select %19, %17, %21 : vector<16x256xi1>, vector<16x256xf32>
    %c0_14 = arith.constant 0 : index
    %c0_15 = arith.constant 0 : index
    %23 = vector.load %arg6[%c0_14, %c0_15] : memref<1x256xf32, #tpu.memory_space<vmem>>, vector<1x256xf32>
    %24 = vector.broadcast %23 : vector<1x256xf32> to vector<16x256xf32>
    %25 = arith.mulf %22, %24 : vector<16x256xf32>
    %cst_16 = arith.constant dense<0.000000e+00> : vector<16xf32>
    %26 = vector.multi_reduction <add>, %25, %cst_16 [1] : vector<16x256xf32> to vector<16xf32>
    %c0_17 = arith.constant 0 : index
    %c0_18 = arith.constant 0 : index
    %27 = memref.load %arg7[%c0_17, %c0_18] : memref<1x1xf32, #tpu.memory_space<smem>>
    %28 = vector.broadcast %27 : f32 to vector<16xf32>
    %29 = arith.addf %26, %28 : vector<16xf32>
    %30 = vector.shape_cast %29 : vector<16xf32> to vector<1x1x16xf32>
    %c0_19 = arith.constant 0 : index
    %c0_20 = arith.constant 0 : index
    %c0_21 = arith.constant 0 : index
    %31 = vector.load %arg8[%c0_19, %c0_20, %c0_21] : memref<1x1x16xf32, #tpu.memory_space<vmem>>, vector<1x1x16xf32>
    tpu.vector_store %arg8[%c0_19, %c0_20, %c0_21], %30 {strides = array<i32>} : memref<1x1x16xf32, #tpu.memory_space<vmem>>, vector<1x1x16xf32>,
    return
  }
  func.func @transform_0(%arg0: i32) -> (i32, i32) {
    %c0_i32 = arith.constant 0 : i32
    %c0_i32_0 = arith.constant 0 : i32
    return %arg0, %c0_i32 : i32, i32
  }
  func.func @transform_1(%arg0: i32) -> (i32, i32) {
    %c0_i32 = arith.constant 0 : i32
    %c0_i32_0 = arith.constant 0 : i32
    %c0_i32_1 = arith.constant 0 : i32
    return %c0_i32, %c0_i32_0 : i32, i32
  }
  func.func @transform_2(%arg0: i32) -> (i32, i32) {
    %c0_i32 = arith.constant 0 : i32
    %c0_i32_0 = arith.constant 0 : i32
    %c0_i32_1 = arith.constant 0 : i32
    return %c0_i32, %c0_i32_0 : i32, i32
  }
  func.func @transform_3(%arg0: i32) -> (i32, i32) {
    %c0_i32 = arith.constant 0 : i32
    %c0_i32_0 = arith.constant 0 : i32
    %c0_i32_1 = arith.constant 0 : i32
    return %c0_i32, %c0_i32_0 : i32, i32
  }
  func.func @transform_4(%arg0: i32) -> (i32, i32) {
    %c0_i32 = arith.constant 0 : i32
    %c0_i32_0 = arith.constant 0 : i32
    %c0_i32_1 = arith.constant 0 : i32
    return %c0_i32, %c0_i32_0 : i32, i32
  }
  func.func @transform_5(%arg0: i32) -> (i32, i32) {
    %c0_i32 = arith.constant 0 : i32
    %c0_i32_0 = arith.constant 0 : i32
    %c0_i32_1 = arith.constant 0 : i32
    return %c0_i32, %c0_i32_0 : i32, i32
  }
  func.func @transform_6(%arg0: i32) -> (i32, i32) {
    %c0_i32 = arith.constant 0 : i32
    %c0_i32_0 = arith.constant 0 : i32
    %c0_i32_1 = arith.constant 0 : i32
    return %c0_i32, %c0_i32_0 : i32, i32
  }
  func.func @transform_7(%arg0: i32) -> (i32, i32, i32) {
    %c0_i32 = arith.constant 0 : i32
    %c0_i32_0 = arith.constant 0 : i32
    %c0_i32_1 = arith.constant 0 : i32
    return %arg0, %c0_i32, %c0_i32_0 : i32, i32, i32
  }
}

</mosaic_0001>

<llo_original>
// kernel: tpu_custom_call.1
$region0: #{tpu_custom_call.1}
  #allocation0 [shape = 'u32[]', space=smem, size = 0x4, offset = 0x4, fixed_abs, tag = 'smem constant byte address 0x4 - core index']
  #allocation1 [shape = 'u32[144,128]{1,0:T(1,128)}', space=vmem, size = 0x12000, scoped, tag = 'internal scratch']
  #allocation2 [shape = 'f32[1,1]{1,0:T(1,128)S(6)}', space=smem, size = 0x200, scoped, tag = 'scoped memory for tpu_custom_call.1']
  %s0 = inlined_call_operand.hbm [shape: f32[48,256], index: 0, kind: input, shape index: {}]
  %s1 = inlined_call_operand.hbm [shape: bf16[256,512], index: 1, kind: input, shape index: {}]
  %s2 = inlined_call_operand.vmem [shape: f32[1,512], index: 2, kind: input, shape index: {}]
  %s3 = inlined_call_operand.hbm [shape: bf16[512,256], index: 3, kind: input, shape index: {}]
  %s4 = inlined_call_operand.vmem [shape: f32[1,256], index: 4, kind: input, shape index: {}]
  %s5 = inlined_call_operand.vmem [shape: f32[1,256], index: 5, kind: input, shape index: {}]
  %s6 = inlined_call_operand.<no memory space> [shape: f32[1,1], index: 6, kind: input, shape index: {}]
  %s7 = inlined_call_operand.hbm [shape: f32[3,1,16], index: 7, kind: output, shape index: {}]
  %s8 = sld [smem:[#allocation0]]
  $region73: #{tpu_custom_call.1} parent=0
    _
  %s10 = ssub.s32 1, %s8
  %s11 = scalar_select 0, %s10, %s8
  %12 = sst [smem:[#allocation2]] %s6
  $region1: #{tpu_custom_call.1} parent=0
    #allocation3 [shape = 'u8[32768]{0}', space=vmem, size = 0x8000, scoped, tag = 'input window, operand 0']
    #allocation4 [shape = 's32[2]{0}', space=sflag, size = 0x8, scoped, tag = 'scoped memory for tpu_custom_call.1']
    #allocation5 [shape = 's32[2]{0}', space=sflag, size = 0x8, scoped, tag = 'scoped memory for tpu_custom_call.1']
    #allocation6 [shape = 'u8[262144]{0}', space=vmem, size = 0x40000, scoped, tag = 'input window, operand 1, single buffered']
    #allocation7 [shape = 's32[1]{0}', space=sflag, size = 0x4, scoped, tag = 'scoped memory for tpu_custom_call.1']
    #allocation8 [shape = 'u8[262144]{0}', space=vmem, size = 0x40000, scoped, tag = 'input window, operand 3, single buffered']
    #allocation9 [shape = 'u8[1024]{0}', space=vmem, size = 0x400, scoped, tag = 'output window, operand 0']
    %13 = vsyncpa [#allocation4], 0
    %s14 = scalar_lea.sflag [#allocation4], 1
    %15 = vsyncpa %s14, 0
    %16 = vsyncpa [#allocation7], 0
    %17 = vsyncpa [#allocation5], 0
    %s18 = scalar_lea.sflag [#allocation5], 1
    %19 = vsyncpa %s18, 0
    loop: start=0, step=1, limit=5
    $region2: #{tpu_custom_call.1} parent=1 // loop_pre_header
      _
    $region3: #{tpu_custom_call.1} parent=1 // loop_header
      %s21 = sphi 0, %s25
      %p22 = scmp.ge.s32.totalorder %s21, 5
      %s31 = sphi 0, %s33
      %s34 = sphi 0, %s31
      %s35 = sphi 0, %s34
      %s51 = sphi 0, %s35
      %s55 = sphi 0, %s55
      %s57 = sphi 0, %s55
      %s58 = sphi 0, %s57
      %s72 = sphi 0, %s58
      %s76 = sphi 0, %s76
      %s78 = sphi 0, %s76
      %s79 = sphi 0, %s78
      %s93 = sphi 0, %s79
      %s97 = sphi 0, %s97
      %s99 = sphi 0, %s97
      %s100 = sphi 0, %s99
      %s114 = sphi 0, %s100
      %s118 = sphi 0, %s118
      %s120 = sphi 0, %s118
      %s121 = sphi 0, %s120
      %s135 = sphi 0, %s121
      %s139 = sphi 0, %s139
      %s141 = sphi 0, %s139
      %s142 = sphi 0, %s141
      %s156 = sphi 0, %s142
      %s160 = sphi 0, %s160
      %s162 = sphi 0, %s160
      %s163 = sphi 0, %s162
      %s177 = sphi 0, %s163
      %s183 = sphi 0, %s185
      %s186 = sphi 0, %s183
      %s187 = sphi 0, %s186
      %s203 = sphi 0, %s187
    $region4: #{tpu_custom_call.1} parent=1 // loop_header_branch
      %24 = sbr.rel (%p22) target = $region8
    $region5: #{tpu_custom_call.1} parent=1 // loop_body
      %s26 = ssub.s32 %s21, 1
      %s27 = ssub.s32 %s21, 2
      %s28 = sadd.s32 %s21, 1
      %s29 = ssub.s32 %s21, %s28
      %p30 = scmp.eq.s32.totalorder %s29, 0
      %s32 = sadd.s32 %s31, 1
      %s33 = scalar_select %p30, %s31, %s32
      %p36 = pneg %p30
      %p37 = scmp.eq.s32.totalorder %s21, 2
      %p38 = por %p36, %p37
      %p39 = scmp.ne.s32.totalorder %s31, %s34
      %p40 = scmp.eq.s32.totalorder %s21, 0
      %p41 = por %p39, %p40
      %p42 = scmp.ne.s32.totalorder %s31, %s34
      %p43 = scmp.eq.s32.totalorder %s26, 2
      %p44 = por %p42, %p43
      %p45 = scmp.ne.s32.totalorder %s34, %s35
      %p46 = scmp.eq.s32.totalorder %s26, 0
      %p47 = por %p45, %p46
      %p48 = scmp.ne.s32.totalorder %s34, %s35
      %p49 = scmp.eq.s32.totalorder %s27, 2
      %p50 = por %p48, %p49
      %p52 = scmp.ne.s32.totalorder %s35, %s51
      %p53 = scmp.eq.s32.totalorder %s27, 0
      %p54 = por %p52, %p53
      %s56 = sadd.s32 %s55, 1
      %p59 = scmp.eq.s32.totalorder %s21, 2
      %p60 = scmp.ne.s32.totalorder %s55, %s57
      %p61 = scmp.eq.s32.totalorder %s21, 0
      %p62 = por %p60, %p61
      %p63 = scmp.ne.s32.totalorder %s55, %s57
      %p64 = scmp.eq.s32.totalorder %s26, 2
      %p65 = por %p63, %p64
      %p66 = scmp.ne.s32.totalorder %s57, %s58
      %p67 = scmp.eq.s32.totalorder %s26, 0
      %p68 = por %p66, %p67
      %p69 = scmp.ne.s32.totalorder %s57, %s58
      %p70 = scmp.eq.s32.totalorder %s27, 2
      %p71 = por %p69, %p70
      %p73 = scmp.ne.s32.totalorder %s58, %s72
      %p74 = scmp.eq.s32.totalorder %s27, 0
      %p75 = por %p73, %p74
      %s77 = sadd.s32 %s76, 1
      %p80 = scmp.eq.s32.totalorder %s21, 2
      %p81 = scmp.ne.s32.totalorder %s76, %s78
      %p82 = scmp.eq.s32.totalorder %s21, 0
      %p83 = por %p81, %p82
      %p84 = scmp.ne.s32.totalorder %s76, %s78
      %p85 = scmp.eq.s32.totalorder %s26, 2
      %p86 = por %p84, %p85
      %p87 = scmp.ne.s32.totalorder %s78, %s79
      %p88 = scmp.eq.s32.totalorder %s26, 0
      %p89 = por %p87, %p88
      %p90 = scmp.ne.s32.totalorder %s78, %s79
      %p91 = scmp.eq.s32.totalorder %s27, 2
      %p92 = por %p90, %p91
      %p94 = scmp.ne.s32.totalorder %s79, %s93
      %p95 = scmp.eq.s32.totalorder %s27, 0
      %p96 = por %p94, %p95
      %s98 = sadd.s32 %s97, 1
      %p101 = scmp.eq.s32.totalorder %s21, 2
      %p102 = scmp.ne.s32.totalorder %s97, %s99
      %p103 = scmp.eq.s32.totalorder %s21, 0
      %p104 = por %p102, %p103
      %p105 = scmp.ne.s32.totalorder %s97, %s99
      %p106 = scmp.eq.s32.totalorder %s26, 2
      %p107 = por %p105, %p106
      %p108 = scmp.ne.s32.totalorder %s99, %s100
      %p109 = scmp.eq.s32.totalorder %s26, 0
      %p110 = por %p108, %p109
      %p111 = scmp.ne.s32.totalorder %s99, %s100
      %p112 = scmp.eq.s32.totalorder %s27, 2
      %p113 = por %p111, %p112
      %p115 = scmp.ne.s32.totalorder %s100, %s114
      %p116 = scmp.eq.s32.totalorder %s27, 0
      %p117 = por %p115, %p116
      %s119 = sadd.s32 %s118, 1
      %p122 = scmp.eq.s32.totalorder %s21, 2
      %p123 = scmp.ne.s32.totalorder %s118, %s120
      %p124 = scmp.eq.s32.totalorder %s21, 0
      %p125 = por %p123, %p124
      %p126 = scmp.ne.s32.totalorder %s118, %s120
      %p127 = scmp.eq.s32.totalorder %s26, 2
      %p128 = por %p126, %p127
      %p129 = scmp.ne.s32.totalorder %s120, %s121
      %p130 = scmp.eq.s32.totalorder %s26, 0
      %p131 = por %p129, %p130
      %p132 = scmp.ne.s32.totalorder %s120, %s121
      %p133 = scmp.eq.s32.totalorder %s27, 2
      %p134 = por %p132, %p133
      %p136 = scmp.ne.s32.totalorder %s121, %s135
      %p137 = scmp.eq.s32.totalorder %s27, 0
      %p138 = por %p136, %p137
      %s140 = sadd.s32 %s139, 1
      %p143 = scmp.eq.s32.totalorder %s21, 2
      %p144 = scmp.ne.s32.totalorder %s139, %s141
      %p145 = scmp.eq.s32.totalorder %s21, 0
      %p146 = por %p144, %p145
      %p147 = scmp.ne.s32.totalorder %s139, %s141
      %p148 = scmp.eq.s32.totalorder %s26, 2
      %p149 = por %p147, %p148
      %p150 = scmp.ne.s32.totalorder %s141, %s142
      %p151 = scmp.eq.s32.totalorder %s26, 0
      %p152 = por %p150, %p151
      %p153 = scmp.ne.s32.totalorder %s141, %s142
      %p154 = scmp.eq.s32.totalorder %s27, 2
      %p155 = por %p153, %p154
      %p157 = scmp.ne.s32.totalorder %s142, %s156
      %p158 = scmp.eq.s32.totalorder %s27, 0
      %p159 = por %p157, %p158
      %s161 = sadd.s32 %s160, 1
      %p164 = scmp.eq.s32.totalorder %s21, 2
      %p165 = scmp.ne.s32.totalorder %s160, %s162
      %p166 = scmp.eq.s32.totalorder %s21, 0
      %p167 = por %p165, %p166
      %p168 = scmp.ne.s32.totalorder %s160, %s162
      %p169 = scmp.eq.s32.totalorder %s26, 2
      %p170 = por %p168, %p169
      %p171 = scmp.ne.s32.totalorder %s162, %s163
      %p172 = scmp.eq.s32.totalorder %s26, 0
      %p173 = por %p171, %p172
      %p174 = scmp.ne.s32.totalorder %s162, %s163
      %p175 = scmp.eq.s32.totalorder %s27, 2
      %p176 = por %p174, %p175
      %p178 = scmp.ne.s32.totalorder %s163, %s177
      %p179 = scmp.eq.s32.totalorder %s27, 0
      %p180 = por %p178, %p179
      %s181 = ssub.s32 %s21, %s28
      %p182 = scmp.eq.s32.totalorder %s181, 0
      %s184 = sadd.s32 %s183, 1
      %s185 = scalar_select %p182, %s183, %s184
      %p188 = pneg %p182
      %p189 = scmp.eq.s32.totalorder %s21, 2
      %p190 = por %p188, %p189
      %p191 = scmp.ne.s32.totalorder %s183, %s186
      %p192 = scmp.eq.s32.totalorder %s21, 0
      %p193 = por %p191, %p192
      %p194 = scmp.ne.s32.totalorder %s183, %s186
      %p195 = scmp.eq.s32.totalorder %s26, 2
      %p196 = por %p194, %p195
      %p197 = scmp.ne.s32.totalorder %s186, %s187
      %p198 = scmp.eq.s32.totalorder %s26, 0
      %p199 = por %p197, %p198
      %p200 = scmp.ne.s32.totalorder %s186, %s187
      %p201 = scmp.eq.s32.totalorder %s27, 2
      %p202 = por %p200, %p201
      %p204 = scmp.ne.s32.totalorder %s187, %s203
      %p205 = scmp.eq.s32.totalorder %s27, 0
      %p206 = por %p204, %p205
      %p207 = scmp.le.s32.totalorder 1, %s21
      %p208 = scmp.lt.s32.totalorder %s21, 4
      %p209 = pnand %p207, %p208
      %p210 = pneg %p209
      // Predicated region
      $region9: #{tpu_custom_call.1} parent=5 // pred_check
        _
      $region10: #{tpu_custom_call.1} parent=5 // pred_check_branch
        %212 = sbr.rel (%p209) target = $region12
      $region11: #{tpu_custom_call.1} parent=5 // pred_region
        %s213 = ssub.s32 %s21, 1
        // Predicated region
        $region13: #{tpu_custom_call.1} parent=11 // pred_check
          %p214 = pneg %p68
        $region14: #{tpu_custom_call.1} parent=11 // pred_check_branch
          %216 = sbr.rel (%p214) target = $region16
        $region15: #{tpu_custom_call.1} parent=11 // pred_region
          %s218 = ssub.s32 8192, 8192
          %219 = vsyncadd [#allocation7], %s218
          %s220 = sshll.u32 [#allocation6], 4
          %s221 = int_to_ptr.vmem [resolvable:$true] %s220
          %226 = dma.hbm_to_vmem [thread:$0]  %s1, 8192, %s221, [#allocation7], 256, 256, 16
        $region16: #{tpu_custom_call.1} parent=11 // pred_fallthru
          _
        // Predicated region
        $region17: #{tpu_custom_call.1} parent=11 // pred_check
          %p227 = pneg %p89
        $region18: #{tpu_custom_call.1} parent=11 // pred_check_branch
          %229 = sbr.rel (%p227) target = $region20
        $region19: #{tpu_custom_call.1} parent=11 // pred_region
          _
        $region20: #{tpu_custom_call.1} parent=11 // pred_fallthru
          _
        // Predicated region
        $region21: #{tpu_custom_call.1} parent=11 // pred_check
          %p230 = pneg %p110
        $region22: #{tpu_custom_call.1} parent=11 // pred_check_branch
          %232 = sbr.rel (%p230) target = $region24
        $region23: #{tpu_custom_call.1} parent=11 // pred_region
          %s234 = ssub.s32 8192, 8192
          %235 = vsyncadd [#allocation7], %s234
          %s236 = sshll.u32 [#allocation8], 4
          %s237 = int_to_ptr.vmem [resolvable:$true] %s236
          %242 = dma.hbm_to_vmem [thread:$0]  %s3, 8192, %s237, [#allocation7], 128, 128, 8
        $region24: #{tpu_custom_call.1} parent=11 // pred_fallthru
          _
        // Predicated region
        $region25: #{tpu_custom_call.1} parent=11 // pred_check
          %p243 = pneg %p131
        $region26: #{tpu_custom_call.1} parent=11 // pred_check_branch
          %245 = sbr.rel (%p243) target = $region28
        $region27: #{tpu_custom_call.1} parent=11 // pred_region
          _
        $region28: #{tpu_custom_call.1} parent=11 // pred_fallthru
          _
        // Predicated region
        $region29: #{tpu_custom_call.1} parent=11 // pred_check
          %p246 = pneg %p152
        $region30: #{tpu_custom_call.1} parent=11 // pred_check_branch
          %248 = sbr.rel (%p246) target = $region32
        $region31: #{tpu_custom_call.1} parent=11 // pred_region
          _
        $region32: #{tpu_custom_call.1} parent=11 // pred_fallthru
          _
        // Predicated region
        $region33: #{tpu_custom_call.1} parent=11 // pred_check
          %p249 = pneg %p173
        $region34: #{tpu_custom_call.1} parent=11 // pred_check_branch
          %251 = sbr.rel (%p249) target = $region36
        $region35: #{tpu_custom_call.1} parent=11 // pred_region
          _
        $region36: #{tpu_custom_call.1} parent=11 // pred_fallthru
          _
      $region12: #{tpu_custom_call.1} parent=5 // pred_fallthru
        _
      %p252 = scmp.lt.s32.totalorder %s21, 3
      // Predicated region
      $region37: #{tpu_custom_call.1} parent=5 // pred_check
        %p253 = pneg %p252
      $region38: #{tpu_custom_call.1} parent=5 // pred_check_branch
        %255 = sbr.rel (%p253) target = $region40
      $region39: #{tpu_custom_call.1} parent=5 // pred_region
        // Predicated region
        $region41: #{tpu_custom_call.1} parent=39 // pred_check
          %p256 = pneg %p41
        $region42: #{tpu_custom_call.1} parent=39 // pred_check_branch
          %258 = sbr.rel (%p256) target = $region44
        $region43: #{tpu_custom_call.1} parent=39 // pred_region
          %s259 = sand.u32 %s31, 1
          %s260 = scalar_lea.sflag [#allocation4], %s259
          %s261 = sand.u32 %s31, 1
          %s262 = smul.addr %s261, 32
          %s263 = scalar_lea.vmem [#allocation3], %s262
          %s264 = smul.u32 2, %s21
          %s266 = ssub.s32 512, 512
          %267 = vsyncadd %s260, %s266
          %s268 = smul.addr %s264, 2
          %s269 = smul.addr %s268, 128
          %s270 = scalar_lea.hbm %s0, %s269
          %s271 = sshll.u32 %s263, 4
          %s272 = int_to_ptr.vmem [resolvable:$true] %s271
          %277 = dma.hbm_to_vmem [thread:$0]  %s270, 512, %s272, %s260, 256, 256, 16
        $region44: #{tpu_custom_call.1} parent=39 // pred_fallthru
          _
      $region40: #{tpu_custom_call.1} parent=5 // pred_fallthru
        _
      %p278 = scmp.le.s32.totalorder 1, %s21
      %p279 = scmp.lt.s32.totalorder %s21, 4
      %p280 = pnand %p278, %p279
      %p281 = pneg %p280
      // Predicated region
      $region45: #{tpu_custom_call.1} parent=5 // pred_check
        _
      $region46: #{tpu_custom_call.1} parent=5 // pred_check_branch
        %283 = sbr.rel (%p280) target = $region48
      $region47: #{tpu_custom_call.1} parent=5 // pred_region
        %s284 = ssub.s32 %s21, 1
        %s285 = sand.u32 %s34, 1
        %s286 = scalar_lea.sflag [#allocation4], %s285
        %s287 = sand.u32 %s34, 1
        %s288 = smul.addr %s287, 32
        %s289 = scalar_lea.vmem [#allocation3], %s288
        // Predicated region
        $region49: #{tpu_custom_call.1} parent=47 // pred_check
          %p290 = pneg %p47
        $region50: #{tpu_custom_call.1} parent=47 // pred_check_branch
          %292 = sbr.rel (%p290) target = $region52
        $region51: #{tpu_custom_call.1} parent=47 // pred_region
          %293 = dma.done %s286, 512
        $region52: #{tpu_custom_call.1} parent=47 // pred_fallthru
          _
        // Predicated region
        $region53: #{tpu_custom_call.1} parent=47 // pred_check
          %p294 = pneg %p68
        $region54: #{tpu_custom_call.1} parent=47 // pred_check_branch
          %296 = sbr.rel (%p294) target = $region56
        $region55: #{tpu_custom_call.1} parent=47 // pred_region
          %297 = dma.done [#allocation7], 8192
        $region56: #{tpu_custom_call.1} parent=47 // pred_fallthru
          _
        // Predicated region
        $region57: #{tpu_custom_call.1} parent=47 // pred_check
          %p298 = pneg %p110
        $region58: #{tpu_custom_call.1} parent=47 // pred_check_branch
          %300 = sbr.rel (%p298) target = $region60
        $region59: #{tpu_custom_call.1} parent=47 // pred_region
          %301 = dma.done [#allocation7], 8192
        $region60: #{tpu_custom_call.1} parent=47 // pred_fallthru
          _
        %s302 = sand.u32 %s34, 1
        %s303 = scalar_lea.sflag [#allocation4], %s302
        %s304 = sand.u32 %s34, 1
        %s305 = smul.addr %s304, 32
        %s306 = scalar_lea.vmem [#allocation3], %s305
        %p307 = pneg %p47
        %p308 = pneg %p44
        %p309 = pneg %p68
        %p310 = pneg %p65
        %p311 = pneg %p89
        %p312 = pneg %p86
        %p313 = pneg %p110
        %p314 = pneg %p107
        %p315 = pneg %p131
        %p316 = pneg %p128
        %p317 = pneg %p152
        %p318 = pneg %p149
        %p319 = pneg %p173
        %p320 = pneg %p170
        %p321 = pneg %p199
        %p322 = pneg %p196
        %s323 = sand.u32 %s186, 1
        %s324 = scalar_lea.sflag [#allocation5], %s323
        %s325 = sand.u32 %s186, 1
        %s326 = scalar_lea.vmem [#allocation9], %s325
        %s327 = smul.u32 2, %s26
        %v328 = vld [vmem:[%s289] sm:$0xff]
        %v329 = vld [vmem:[%s289 + $0x8] sm:$0xff]
        %v330 = vld [vmem:[%s289 + $0x10] sm:$0xff]
        %v331 = vld [vmem:[%s289 + $0x18] sm:$0xff]
        %v332 = vpack.c.bf16 %v330, %v328
        %v333 = vpack.c.bf16 %v331, %v329
        %v334 = vld [vmem:[#allocation6] sm:$0xff]
        %v335 = vld [vmem:[#allocation6 + $0x8] sm:$0xff]
        %v336 = vld [vmem:[#allocation6 + $0x10] sm:$0xff]
        %v337 = vld [vmem:[#allocation6 + $0x18] sm:$0xff]
        %v338 = vld [vmem:[#allocation6 + $0x20] sm:$0xff]
        %v339 = vld [vmem:[#allocation6 + $0x28] sm:$0xff]
        %v340 = vld [vmem:[#allocation6 + $0x30] sm:$0xff]
        %v341 = vld [vmem:[#allocation6 + $0x38] sm:$0xff]
        %v342 = vld [vmem:[#allocation6 + $0x40] sm:$0xff]
        %v343 = vld [vmem:[#allocation6 + $0x48] sm:$0xff]
        %v344 = vld [vmem:[#allocation6 + $0x50] sm:$0xff]
        %v345 = vld [vmem:[#allocation6 + $0x58] sm:$0xff]
        %v346 = vld [vmem:[#allocation6 + $0x60] sm:$0xff]
        %v347 = vld [vmem:[#allocation6 + $0x68] sm:$0xff]
        %v348 = vld [vmem:[#allocation6 + $0x70] sm:$0xff]
        %v349 = vld [vmem:[#allocation6 + $0x78] sm:$0xff]
        %v350 = vld [vmem:[#allocation6 + $0x80] sm:$0xff]
        %v351 = vld [vmem:[#allocation6 + $0x88] sm:$0xff]
        %v352 = vld [vmem:[#allocation6 + $0x90] sm:$0xff]
        %v353 = vld [vmem:[#allocation6 + $0x98] sm:$0xff]
        %v354 = vld [vmem:[#allocation6 + $0xa0] sm:$0xff]
        %v355 = vld [vmem:[#allocation6 + $0xa8] sm:$0xff]
        %v356 = vld [vmem:[#allocation6 + $0xb0] sm:$0xff]
        %v357 = vld [vmem:[#allocation6 + $0xb8] sm:$0xff]
        %v358 = vld [vmem:[#allocation6 + $0xc0] sm:$0xff]
        %v359 = vld [vmem:[#allocation6 + $0xc8] sm:$0xff]
        %v360 = vld [vmem:[#allocation6 + $0xd0] sm:$0xff]
        %v361 = vld [vmem:[#allocation6 + $0xd8] sm:$0xff]
        %v362 = vld [vmem:[#allocation6 + $0xe0] sm:$0xff]
        %v363 = vld [vmem:[#allocation6 + $0xe8] sm:$0xff]
        %v364 = vld [vmem:[#allocation6 + $0xf0] sm:$0xff]
        %v365 = vld [vmem:[#allocation6 + $0xf8] sm:$0xff]
        %v366 = vld [vmem:[#allocation6 + $0x100] sm:$0xff]
        %v367 = vld [vmem:[#allocation6 + $0x108] sm:$0xff]
        %v368 = vld [vmem:[#allocation6 + $0x110] sm:$0xff]
        %v369 = vld [vmem:[#allocation6 + $0x118] sm:$0xff]
        %v370 = vld [vmem:[#allocation6 + $0x120] sm:$0xff]
        %v371 = vld [vmem:[#allocation6 + $0x128] sm:$0xff]
        %v372 = vld [vmem:[#allocation6 + $0x130] sm:$0xff]
        %v373 = vld [vmem:[#allocation6 + $0x138] sm:$0xff]
        %v374 = vld [vmem:[#allocation6 + $0x140] sm:$0xff]
        %v375 = vld [vmem:[#allocation6 + $0x148] sm:$0xff]
        %v376 = vld [vmem:[#allocation6 + $0x150] sm:$0xff]
        %v377 = vld [vmem:[#allocation6 + $0x158] sm:$0xff]
        %v378 = vld [vmem:[#allocation6 + $0x160] sm:$0xff]
        %v379 = vld [vmem:[#allocation6 + $0x168] sm:$0xff]
        %v380 = vld [vmem:[#allocation6 + $0x170] sm:$0xff]
        %v381 = vld [vmem:[#allocation6 + $0x178] sm:$0xff]
        %v382 = vld [vmem:[#allocation6 + $0x180] sm:$0xff]
        %v383 = vld [vmem:[#allocation6 + $0x188] sm:$0xff]
        %v384 = vld [vmem:[#allocation6 + $0x190] sm:$0xff]
        %v385 = vld [vmem:[#allocation6 + $0x198] sm:$0xff]
        %v386 = vld [vmem:[#allocation6 + $0x1a0] sm:$0xff]
        %v387 = vld [vmem:[#allocation6 + $0x1a8] sm:$0xff]
        %v388 = vld [vmem:[#allocation6 + $0x1b0] sm:$0xff]
        %v389 = vld [vmem:[#allocation6 + $0x1b8] sm:$0xff]
        %v390 = vld [vmem:[#allocation6 + $0x1c0] sm:$0xff]
        %v391 = vld [vmem:[#allocation6 + $0x1c8] sm:$0xff]
        %v392 = vld [vmem:[#allocation6 + $0x1d0] sm:$0xff]
        %v393 = vld [vmem:[#allocation6 + $0x1d8] sm:$0xff]
        %v394 = vld [vmem:[#allocation6 + $0x1e0] sm:$0xff]
        %v395 = vld [vmem:[#allocation6 + $0x1e8] sm:$0xff]
        %v396 = vld [vmem:[#allocation6 + $0x1f0] sm:$0xff]
        %v397 = vld [vmem:[#allocation6 + $0x1f8] sm:$0xff]
        %v398 = vld [vmem:[%s2] sm:$0xf]
        %v400 = vlaneseq
        %v401 = vshrl.u32 %v400, 7
        %v402 = vsub.s32 0, %v401
        %v403 = vrot.slane %v398, %v402
        %v404 = vlaneseq
        %v405 = vshrl.u32 %v404, 7
        %v406 = vsub.s32 1, %v405
        %v407 = vrot.slane %v398, %v406
        %v408 = vlaneseq
        %v409 = vshrl.u32 %v408, 7
        %v410 = vsub.s32 2, %v409
        %v411 = vrot.slane %v398, %v410
        %v412 = vlaneseq
        %v413 = vshrl.u32 %v412, 7
        %v414 = vsub.s32 3, %v413
        %v415 = vrot.slane %v398, %v414
        %v484 = vunpack.c.l.b16 %v334
        %v485 = vunpack.c.h.b16 %v334
        %v486 = vunpack.c.l.b16 %v335
        %v487 = vunpack.c.h.b16 %v335
        %v488 = vunpack.c.l.b16 %v336
        %v489 = vunpack.c.h.b16 %v336
        %v490 = vunpack.c.l.b16 %v337
        %v491 = vunpack.c.h.b16 %v337
        %v492 = vunpack.c.l.b16 %v338
        %v493 = vunpack.c.h.b16 %v338
        %v494 = vunpack.c.l.b16 %v339
        %v495 = vunpack.c.h.b16 %v339
        %v496 = vunpack.c.l.b16 %v340
        %v497 = vunpack.c.h.b16 %v340
        %v498 = vunpack.c.l.b16 %v341
        %v499 = vunpack.c.h.b16 %v341
        %v500 = vunpack.c.l.b16 %v342
        %v501 = vunpack.c.h.b16 %v342
        %v502 = vunpack.c.l.b16 %v343
        %v503 = vunpack.c.h.b16 %v343
        %v504 = vunpack.c.l.b16 %v344
        %v505 = vunpack.c.h.b16 %v344
        %v506 = vunpack.c.l.b16 %v345
        %v507 = vunpack.c.h.b16 %v345
        %v508 = vunpack.c.l.b16 %v346
        %v509 = vunpack.c.h.b16 %v346
        %v510 = vunpack.c.l.b16 %v347
        %v511 = vunpack.c.h.b16 %v347
        %v512 = vunpack.c.l.b16 %v348
        %v513 = vunpack.c.h.b16 %v348
        %v514 = vunpack.c.l.b16 %v349
        %v515 = vunpack.c.h.b16 %v349
        %v516 = vunpack.c.l.b16 %v350
        %v517 = vunpack.c.h.b16 %v350
        %v518 = vunpack.c.l.b16 %v351
        %v519 = vunpack.c.h.b16 %v351
        %v520 = vunpack.c.l.b16 %v352
        %v521 = vunpack.c.h.b16 %v352
        %v522 = vunpack.c.l.b16 %v353
        %v523 = vunpack.c.h.b16 %v353
        %v524 = vunpack.c.l.b16 %v354
        %v525 = vunpack.c.h.b16 %v354
        %v526 = vunpack.c.l.b16 %v355
        %v527 = vunpack.c.h.b16 %v355
        %v528 = vunpack.c.l.b16 %v356
        %v529 = vunpack.c.h.b16 %v356
        %v530 = vunpack.c.l.b16 %v357
        %v531 = vunpack.c.h.b16 %v357
        %v532 = vunpack.c.l.b16 %v358
        %v533 = vunpack.c.h.b16 %v358
        %v534 = vunpack.c.l.b16 %v359
        %v535 = vunpack.c.h.b16 %v359
        %v536 = vunpack.c.l.b16 %v360
        %v537 = vunpack.c.h.b16 %v360
        %v538 = vunpack.c.l.b16 %v361
        %v539 = vunpack.c.h.b16 %v361
        %v540 = vunpack.c.l.b16 %v362
        %v541 = vunpack.c.h.b16 %v362
        %v542 = vunpack.c.l.b16 %v363
        %v543 = vunpack.c.h.b16 %v363
        %v544 = vunpack.c.l.b16 %v364
        %v545 = vunpack.c.h.b16 %v364
        %v546 = vunpack.c.l.b16 %v365
        %v547 = vunpack.c.h.b16 %v365
        %v548 = vunpack.c.l.b16 %v366
        %v549 = vunpack.c.h.b16 %v366
        %v550 = vunpack.c.l.b16 %v367
        %v551 = vunpack.c.h.b16 %v367
        %v552 = vunpack.c.l.b16 %v368
        %v553 = vunpack.c.h.b16 %v368
        %v554 = vunpack.c.l.b16 %v369
        %v555 = vunpack.c.h.b16 %v369
        %v556 = vunpack.c.l.b16 %v370
        %v557 = vunpack.c.h.b16 %v370
        %v558 = vunpack.c.l.b16 %v371
        %v559 = vunpack.c.h.b16 %v371
        %v560 = vunpack.c.l.b16 %v372
        %v561 = vunpack.c.h.b16 %v372
        %v562 = vunpack.c.l.b16 %v373
        %v563 = vunpack.c.h.b16 %v373
        %v564 = vunpack.c.l.b16 %v374
        %v565 = vunpack.c.h.b16 %v374
        %v566 = vunpack.c.l.b16 %v375
        %v567 = vunpack.c.h.b16 %v375
        %v568 = vunpack.c.l.b16 %v376
        %v569 = vunpack.c.h.b16 %v376
        %v570 = vunpack.c.l.b16 %v377
        %v571 = vunpack.c.h.b16 %v377
        %v572 = vunpack.c.l.b16 %v378
        %v573 = vunpack.c.h.b16 %v378
        %v574 = vunpack.c.l.b16 %v379
        %v575 = vunpack.c.h.b16 %v379
        %v576 = vunpack.c.l.b16 %v380
        %v577 = vunpack.c.h.b16 %v380
        %v578 = vunpack.c.l.b16 %v381
        %v579 = vunpack.c.h.b16 %v381
        %v580 = vunpack.c.l.b16 %v382
        %v581 = vunpack.c.h.b16 %v382
        %v582 = vunpack.c.l.b16 %v383
        %v583 = vunpack.c.h.b16 %v383
        %v584 = vunpack.c.l.b16 %v384
        %v585 = vunpack.c.h.b16 %v384
        %v586 = vunpack.c.l.b16 %v385
        %v587 = vunpack.c.h.b16 %v385
        %v588 = vunpack.c.l.b16 %v386
        %v589 = vunpack.c.h.b16 %v386
        %v590 = vunpack.c.l.b16 %v387
        %v591 = vunpack.c.h.b16 %v387
        %v592 = vunpack.c.l.b16 %v388
        %v593 = vunpack.c.h.b16 %v388
        %v594 = vunpack.c.l.b16 %v389
        %v595 = vunpack.c.h.b16 %v389
        %v596 = vunpack.c.l.b16 %v390
        %v597 = vunpack.c.h.b16 %v390
        %v598 = vunpack.c.l.b16 %v391
        %v599 = vunpack.c.h.b16 %v391
        %v600 = vunpack.c.l.b16 %v392
        %v601 = vunpack.c.h.b16 %v392
        %v602 = vunpack.c.l.b16 %v393
        %v603 = vunpack.c.h.b16 %v393
        %v604 = vunpack.c.l.b16 %v394
        %v605 = vunpack.c.h.b16 %v394
        %v606 = vunpack.c.l.b16 %v395
        %v607 = vunpack.c.h.b16 %v395
        %v608 = vunpack.c.l.b16 %v396
        %v609 = vunpack.c.h.b16 %v396
        %v610 = vunpack.c.l.b16 %v397
        %v611 = vunpack.c.h.b16 %v397
        %v612 = vpack.c.b16 %v488, %v484
        %v613 = vpack.c.b16 %v489, %v485
        %v614 = vpack.c.b16 %v490, %v486
        %v615 = vpack.c.b16 %v491, %v487
        %v616 = vpack.c.b16 %v496, %v492
        %v617 = vpack.c.b16 %v497, %v493
        %v618 = vpack.c.b16 %v498, %v494
        %v619 = vpack.c.b16 %v499, %v495
        %v620 = vpack.c.b16 %v504, %v500
        %v621 = vpack.c.b16 %v505, %v501
        %v622 = vpack.c.b16 %v506, %v502
        %v623 = vpack.c.b16 %v507, %v503
        %v624 = vpack.c.b16 %v512, %v508
        %v625 = vpack.c.b16 %v513, %v509
        %v626 = vpack.c.b16 %v514, %v510
        %v627 = vpack.c.b16 %v515, %v511
        %v628 = vpack.c.b16 %v520, %v516
        %v629 = vpack.c.b16 %v521, %v517
        %v630 = vpack.c.b16 %v522, %v518
        %v631 = vpack.c.b16 %v523, %v519
        %v632 = vpack.c.b16 %v528, %v524
        %v633 = vpack.c.b16 %v529, %v525
        %v634 = vpack.c.b16 %v530, %v526
        %v635 = vpack.c.b16 %v531, %v527
        %v636 = vpack.c.b16 %v536, %v532
        %v637 = vpack.c.b16 %v537, %v533
        %v638 = vpack.c.b16 %v538, %v534
        %v639 = vpack.c.b16 %v539, %v535
        %v640 = vpack.c.b16 %v544, %v540
        %v641 = vpack.c.b16 %v545, %v541
        %v642 = vpack.c.b16 %v546, %v542
        %v643 = vpack.c.b16 %v547, %v543
        %v644 = vpack.c.b16 %v552, %v548
        %v645 = vpack.c.b16 %v553, %v549
        %v646 = vpack.c.b16 %v554, %v550
        %v647 = vpack.c.b16 %v555, %v551
        %v648 = vpack.c.b16 %v560, %v556
        %v649 = vpack.c.b16 %v561, %v557
        %v650 = vpack.c.b16 %v562, %v558
        %v651 = vpack.c.b16 %v563, %v559
        %v652 = vpack.c.b16 %v568, %v564
        %v653 = vpack.c.b16 %v569, %v565
        %v654 = vpack.c.b16 %v570, %v566
        %v655 = vpack.c.b16 %v571, %v567
        %v656 = vpack.c.b16 %v576, %v572
        %v657 = vpack.c.b16 %v577, %v573
        %v658 = vpack.c.b16 %v578, %v574
        %v659 = vpack.c.b16 %v579, %v575
        %v660 = vpack.c.b16 %v584, %v580
        %v661 = vpack.c.b16 %v585, %v581
        %v662 = vpack.c.b16 %v586, %v582
        %v663 = vpack.c.b16 %v587, %v583
        %v664 = vpack.c.b16 %v592, %v588
        %v665 = vpack.c.b16 %v593, %v589
        %v666 = vpack.c.b16 %v594, %v590
        %v667 = vpack.c.b16 %v595, %v591
        %v668 = vpack.c.b16 %v600, %v596
        %v669 = vpack.c.b16 %v601, %v597
        %v670 = vpack.c.b16 %v602, %v598
        %v671 = vpack.c.b16 %v603, %v599
        %v672 = vpack.c.b16 %v608, %v604
        %v673 = vpack.c.b16 %v609, %v605
        %v674 = vpack.c.b16 %v610, %v606
        %v675 = vpack.c.b16 %v611, %v607
        %740 = vmatprep.subr.bf16.mxu0 %v613
        %741 = vmatpush1.bf16.msra.mxu0 %v612
        %742 = vmatprep.subr.bf16.mxu0 %v617
        %743 = vmatpush1.bf16.msra.mxu0 %v616
        %744 = vmatprep.subr.bf16.mxu0 %v621
        %745 = vmatpush1.bf16.msra.mxu0 %v620
        %746 = vmatprep.subr.bf16.mxu0 %v625
        %747 = vmatpush1.bf16.msra.mxu0 %v624
        %748 = vmatprep.subr.bf16.mxu0 %v629
        %749 = vmatpush1.bf16.msra.mxu0 %v628
        %750 = vmatprep.subr.bf16.mxu0 %v633
        %751 = vmatpush1.bf16.msra.mxu0 %v632
        %752 = vmatprep.subr.bf16.mxu0 %v637
        %753 = vmatpush1.bf16.msra.mxu0 %v636
        %754 = vmatprep.subr.bf16.mxu0 %v641
        %755 = vmatpush1.bf16.msra.mxu0 %v640
        %756 = vmatprep.subr.bf16.mxu0 %v645
        %757 = vmatpush1.bf16.msra.mxu0 %v644
        %758 = vmatprep.subr.bf16.mxu0 %v649
        %759 = vmatpush1.bf16.msra.mxu0 %v648
        %760 = vmatprep.subr.bf16.mxu0 %v653
        %761 = vmatpush1.bf16.msra.mxu0 %v652
        %762 = vmatprep.subr.bf16.mxu0 %v657
        %763 = vmatpush1.bf16.msra.mxu0 %v656
        %764 = vmatprep.subr.bf16.mxu0 %v661
        %765 = vmatpush1.bf16.msra.mxu0 %v660
        %766 = vmatprep.subr.bf16.mxu0 %v665
        %767 = vmatpush1.bf16.msra.mxu0 %v664
        %768 = vmatprep.subr.bf16.mxu0 %v669
        %769 = vmatpush1.bf16.msra.mxu0 %v668
        %770 = vmatprep.subr.bf16.mxu0 %v673
        %771 = vmatpush1.bf16.msra.mxu0 %v672
        %772 = vmatprep.mubr.bf16.mxu0 %v333
        %773 = vmatmul.mubr.bf16.gmra.mrb[0].mxu0 %v332
        %v774 = vpop.f32.mrb[0].mxu0
        %v775 = vadd.f32 %v403, %v774
        %v776 = vpop.f32.mrb[0].mxu0
        %v777 = vadd.f32 %v407, %v776
        %v778 = vpop.f32.mrb[0].mxu0
        %v779 = vadd.f32 %v403, %v778
        %v780 = vpop.f32.mrb[0].mxu0
        %v781 = vadd.f32 %v407, %v780
        %782 = vdwg.mxu0
        %783 = vmatprep.subr.bf16.mxu0 %v615
        %784 = vmatpush1.bf16.msra.mxu0 %v614
        %785 = vmatprep.subr.bf16.mxu0 %v619
        %786 = vmatpush1.bf16.msra.mxu0 %v618
        %787 = vmatprep.subr.bf16.mxu0 %v623
        %788 = vmatpush1.bf16.msra.mxu0 %v622
        %789 = vmatprep.subr.bf16.mxu0 %v627
        %790 = vmatpush1.bf16.msra.mxu0 %v626
        %791 = vmatprep.subr.bf16.mxu0 %v631
        %792 = vmatpush1.bf16.msra.mxu0 %v630
        %793 = vmatprep.subr.bf16.mxu0 %v635
        %794 = vmatpush1.bf16.msra.mxu0 %v634
        %795 = vmatprep.subr.bf16.mxu0 %v639
        %796 = vmatpush1.bf16.msra.mxu0 %v638
        %797 = vmatprep.subr.bf16.mxu0 %v643
        %798 = vmatpush1.bf16.msra.mxu0 %v642
        %799 = vmatprep.subr.bf16.mxu0 %v647
        %800 = vmatpush1.bf16.msra.mxu0 %v646
        %801 = vmatprep.subr.bf16.mxu0 %v651
        %802 = vmatpush1.bf16.msra.mxu0 %v650
        %803 = vmatprep.subr.bf16.mxu0 %v655
        %804 = vmatpush1.bf16.msra.mxu0 %v654
        %805 = vmatprep.subr.bf16.mxu0 %v659
        %806 = vmatpush1.bf16.msra.mxu0 %v658
        %807 = vmatprep.subr.bf16.mxu0 %v663
        %808 = vmatpush1.bf16.msra.mxu0 %v662
        %809 = vmatprep.subr.bf16.mxu0 %v667
        %810 = vmatpush1.bf16.msra.mxu0 %v666
        %811 = vmatprep.subr.bf16.mxu0 %v671
        %812 = vmatpush1.bf16.msra.mxu0 %v670
        %813 = vmatprep.subr.bf16.mxu0 %v675
        %814 = vmatpush1.bf16.msra.mxu0 %v674
        %815 = vmatprep.mubr.bf16.mxu0 %v333
        %816 = vmatmul.mubr.bf16.gmra.mrb[0].mxu0 %v332
        %v817 = vpop.f32.mrb[0].mxu0
        %v818 = vadd.f32 %v411, %v817
        %v819 = vpop.f32.mrb[0].mxu0
        %v820 = vadd.f32 %v415, %v819
        %v821 = vpop.f32.mrb[0].mxu0
        %v822 = vadd.f32 %v411, %v821
        %v823 = vpop.f32.mrb[0].mxu0
        %v824 = vadd.f32 %v415, %v823
        %825 = vdwg.mxu0
        %vm826 = vcmp.gt.f32.partialorder %v775, 0.0
        %vm827 = vcmp.gt.f32.partialorder %v777, 0.0
        %vm828 = vcmp.gt.f32.partialorder %v818, 0.0
        %vm829 = vcmp.gt.f32.partialorder %v820, 0.0
        %vm830 = vcmp.gt.f32.partialorder %v779, 0.0
        %vm831 = vcmp.gt.f32.partialorder %v781, 0.0
        %vm832 = vcmp.gt.f32.partialorder %v822, 0.0
        %vm833 = vcmp.gt.f32.partialorder %v824, 0.0
        %v834 = vmul.f32 %v775, 0.2
        %v835 = vmul.f32 %v777, 0.2
        %v836 = vmul.f32 %v818, 0.2
        %v837 = vmul.f32 %v820, 0.2
        %v838 = vmul.f32 %v779, 0.2
        %v839 = vmul.f32 %v781, 0.2
        %v840 = vmul.f32 %v822, 0.2
        %v841 = vmul.f32 %v824, 0.2
        %v842 = vsel %vm826, %v775, %v834
        %v843 = vsel %vm827, %v777, %v835
        %v844 = vsel %vm828, %v818, %v836
        %v845 = vsel %vm829, %v820, %v837
        %v846 = vsel %vm830, %v779, %v838
        %v847 = vsel %vm831, %v781, %v839
        %v848 = vsel %vm832, %v822, %v840
        %v849 = vsel %vm833, %v824, %v841
        %v850 = vpack.c.bf16 %v846, %v842
        %v851 = vpack.c.bf16 %v847, %v843
        %v852 = vpack.c.bf16 %v848, %v844
        %v853 = vpack.c.bf16 %v849, %v845
        %v854 = vld [vmem:[#allocation8] sm:$0xff]
        %v855 = vld [vmem:[#allocation8 + $0x8] sm:$0xff]
        %v856 = vld [vmem:[#allocation8 + $0x10] sm:$0xff]
        %v857 = vld [vmem:[#allocation8 + $0x18] sm:$0xff]
        %v858 = vld [vmem:[#allocation8 + $0x20] sm:$0xff]
        %v859 = vld [vmem:[#allocation8 + $0x28] sm:$0xff]
        %v860 = vld [vmem:[#allocation8 + $0x30] sm:$0xff]
        %v861 = vld [vmem:[#allocation8 + $0x38] sm:$0xff]
        %v862 = vld [vmem:[#allocation8 + $0x40] sm:$0xff]
        %v863 = vld [vmem:[#allocation8 + $0x48] sm:$0xff]
        %v864 = vld [vmem:[#allocation8 + $0x50] sm:$0xff]
        %v865 = vld [vmem:[#allocation8 + $0x58] sm:$0xff]
        %v866 = vld [vmem:[#allocation8 + $0x60] sm:$0xff]
        %v867 = vld [vmem:[#allocation8 + $0x68] sm:$0xff]
        %v868 = vld [vmem:[#allocation8 + $0x70] sm:$0xff]
        %v869 = vld [vmem:[#allocation8 + $0x78] sm:$0xff]
        %v870 = vld [vmem:[#allocation8 + $0x80] sm:$0xff]
        %v871 = vld [vmem:[#allocation8 + $0x88] sm:$0xff]
        %v872 = vld [vmem:[#allocation8 + $0x90] sm:$0xff]
        %v873 = vld [vmem:[#allocation8 + $0x98] sm:$0xff]
        %v874 = vld [vmem:[#allocation8 + $0xa0] sm:$0xff]
        %v875 = vld [vmem:[#allocation8 + $0xa8] sm:$0xff]
        %v876 = vld [vmem:[#allocation8 + $0xb0] sm:$0xff]
        %v877 = vld [vmem:[#allocation8 + $0xb8] sm:$0xff]
        %v878 = vld [vmem:[#allocation8 + $0xc0] sm:$0xff]
        %v879 = vld [vmem:[#allocation8 + $0xc8] sm:$0xff]
        %v880 = vld [vmem:[#allocation8 + $0xd0] sm:$0xff]
        %v881 = vld [vmem:[#allocation8 + $0xd8] sm:$0xff]
        %v882 = vld [vmem:[#allocation8 + $0xe0] sm:$0xff]
        %v883 = vld [vmem:[#allocation8 + $0xe8] sm:$0xff]
        %v884 = vld [vmem:[#allocation8 + $0xf0] sm:$0xff]
        %v885 = vld [vmem:[#allocation8 + $0xf8] sm:$0xff]
        %v886 = vld [vmem:[#allocation8 + $0x100] sm:$0xff]
        %v887 = vld [vmem:[#allocation8 + $0x108] sm:$0xff]
        %v888 = vld [vmem:[#allocation8 + $0x110] sm:$0xff]
        %v889 = vld [vmem:[#allocation8 + $0x118] sm:$0xff]
        %v890 = vld [vmem:[#allocation8 + $0x120] sm:$0xff]
        %v891 = vld [vmem:[#allocation8 + $0x128] sm:$0xff]
        %v892 = vld [vmem:[#allocation8 + $0x130] sm:$0xff]
        %v893 = vld [vmem:[#allocation8 + $0x138] sm:$0xff]
        %v894 = vld [vmem:[#allocation8 + $0x140] sm:$0xff]
        %v895 = vld [vmem:[#allocation8 + $0x148] sm:$0xff]
        %v896 = vld [vmem:[#allocation8 + $0x150] sm:$0xff]
        %v897 = vld [vmem:[#allocation8 + $0x158] sm:$0xff]
        %v898 = vld [vmem:[#allocation8 + $0x160] sm:$0xff]
        %v899 = vld [vmem:[#allocation8 + $0x168] sm:$0xff]
        %v900 = vld [vmem:[#allocation8 + $0x170] sm:$0xff]
        %v901 = vld [vmem:[#allocation8 + $0x178] sm:$0xff]
        %v902 = vld [vmem:[#allocation8 + $0x180] sm:$0xff]
        %v903 = vld [vmem:[#allocation8 + $0x188] sm:$0xff]
        %v904 = vld [vmem:[#allocation8 + $0x190] sm:$0xff]
        %v905 = vld [vmem:[#allocation8 + $0x198] sm:$0xff]
        %v906 = vld [vmem:[#allocation8 + $0x1a0] sm:$0xff]
        %v907 = vld [vmem:[#allocation8 + $0x1a8] sm:$0xff]
        %v908 = vld [vmem:[#allocation8 + $0x1b0] sm:$0xff]
        %v909 = vld [vmem:[#allocation8 + $0x1b8] sm:$0xff]
        %v910 = vld [vmem:[#allocation8 + $0x1c0] sm:$0xff]
        %v911 = vld [vmem:[#allocation8 + $0x1c8] sm:$0xff]
        %v912 = vld [vmem:[#allocation8 + $0x1d0] sm:$0xff]
        %v913 = vld [vmem:[#allocation8 + $0x1d8] sm:$0xff]
        %v914 = vld [vmem:[#allocation8 + $0x1e0] sm:$0xff]
        %v915 = vld [vmem:[#allocation8 + $0x1e8] sm:$0xff]
        %v916 = vld [vmem:[#allocation8 + $0x1f0] sm:$0xff]
        %v917 = vld [vmem:[#allocation8 + $0x1f8] sm:$0xff]
        %v918 = vld [vmem:[%s4] sm:$0x3]
        %v920 = vlaneseq
        %v921 = vshrl.u32 %v920, 7
        %v922 = vsub.s32 0, %v921
        %v923 = vrot.slane %v918, %v922
        %v924 = vlaneseq
        %v925 = vshrl.u32 %v924, 7
        %v926 = vsub.s32 1, %v925
        %v927 = vrot.slane %v918, %v926
        %v994 = vunpack.c.l.b16 %v854
        %v995 = vunpack.c.h.b16 %v854
        %v996 = vunpack.c.l.b16 %v855
        %v997 = vunpack.c.h.b16 %v855
        %v998 = vunpack.c.l.b16 %v856
        %v999 = vunpack.c.h.b16 %v856
        %v1000 = vunpack.c.l.b16 %v857
        %v1001 = vunpack.c.h.b16 %v857
        %v1002 = vunpack.c.l.b16 %v858
        %v1003 = vunpack.c.h.b16 %v858
        %v1004 = vunpack.c.l.b16 %v859
        %v1005 = vunpack.c.h.b16 %v859
        %v1006 = vunpack.c.l.b16 %v860
        %v1007 = vunpack.c.h.b16 %v860
        %v1008 = vunpack.c.l.b16 %v861
        %v1009 = vunpack.c.h.b16 %v861
        %v1010 = vunpack.c.l.b16 %v862
        %v1011 = vunpack.c.h.b16 %v862
        %v1012 = vunpack.c.l.b16 %v863
        %v1013 = vunpack.c.h.b16 %v863
        %v1014 = vunpack.c.l.b16 %v864
        %v1015 = vunpack.c.h.b16 %v864
        %v1016 = vunpack.c.l.b16 %v865
        %v1017 = vunpack.c.h.b16 %v865
        %v1018 = vunpack.c.l.b16 %v866
        %v1019 = vunpack.c.h.b16 %v866
        %v1020 = vunpack.c.l.b16 %v867
        %v1021 = vunpack.c.h.b16 %v867
        %v1022 = vunpack.c.l.b16 %v868
        %v1023 = vunpack.c.h.b16 %v868
        %v1024 = vunpack.c.l.b16 %v869
        %v1025 = vunpack.c.h.b16 %v869
        %v1026 = vunpack.c.l.b16 %v870
        %v1027 = vunpack.c.h.b16 %v870
        %v1028 = vunpack.c.l.b16 %v871
        %v1029 = vunpack.c.h.b16 %v871
        %v1030 = vunpack.c.l.b16 %v872
        %v1031 = vunpack.c.h.b16 %v872
        %v1032 = vunpack.c.l.b16 %v873
        %v1033 = vunpack.c.h.b16 %v873
        %v1034 = vunpack.c.l.b16 %v874
        %v1035 = vunpack.c.h.b16 %v874
        %v1036 = vunpack.c.l.b16 %v875
        %v1037 = vunpack.c.h.b16 %v875
        %v1038 = vunpack.c.l.b16 %v876
        %v1039 = vunpack.c.h.b16 %v876
        %v1040 = vunpack.c.l.b16 %v877
        %v1041 = vunpack.c.h.b16 %v877
        %v1042 = vunpack.c.l.b16 %v878
        %v1043 = vunpack.c.h.b16 %v878
        %v1044 = vunpack.c.l.b16 %v879
        %v1045 = vunpack.c.h.b16 %v879
        %v1046 = vunpack.c.l.b16 %v880
        %v1047 = vunpack.c.h.b16 %v880
        %v1048 = vunpack.c.l.b16 %v881
        %v1049 = vunpack.c.h.b16 %v881
        %v1050 = vunpack.c.l.b16 %v882
        %v1051 = vunpack.c.h.b16 %v882
        %v1052 = vunpack.c.l.b16 %v883
        %v1053 = vunpack.c.h.b16 %v883
        %v1054 = vunpack.c.l.b16 %v884
        %v1055 = vunpack.c.h.b16 %v884
        %v1056 = vunpack.c.l.b16 %v885
        %v1057 = vunpack.c.h.b16 %v885
        %v1058 = vunpack.c.l.b16 %v886
        %v1059 = vunpack.c.h.b16 %v886
        %v1060 = vunpack.c.l.b16 %v887
        %v1061 = vunpack.c.h.b16 %v887
        %v1062 = vunpack.c.l.b16 %v888
        %v1063 = vunpack.c.h.b16 %v888
        %v1064 = vunpack.c.l.b16 %v889
        %v1065 = vunpack.c.h.b16 %v889
        %v1066 = vunpack.c.l.b16 %v890
        %v1067 = vunpack.c.h.b16 %v890
        %v1068 = vunpack.c.l.b16 %v891
        %v1069 = vunpack.c.h.b16 %v891
        %v1070 = vunpack.c.l.b16 %v892
        %v1071 = vunpack.c.h.b16 %v892
        %v1072 = vunpack.c.l.b16 %v893
        %v1073 = vunpack.c.h.b16 %v893
        %v1074 = vunpack.c.l.b16 %v894
        %v1075 = vunpack.c.h.b16 %v894
        %v1076 = vunpack.c.l.b16 %v895
        %v1077 = vunpack.c.h.b16 %v895
        %v1078 = vunpack.c.l.b16 %v896
        %v1079 = vunpack.c.h.b16 %v896
        %v1080 = vunpack.c.l.b16 %v897
        %v1081 = vunpack.c.h.b16 %v897
        %v1082 = vunpack.c.l.b16 %v898
        %v1083 = vunpack.c.h.b16 %v898
        %v1084 = vunpack.c.l.b16 %v899
        %v1085 = vunpack.c.h.b16 %v899
        %v1086 = vunpack.c.l.b16 %v900
        %v1087 = vunpack.c.h.b16 %v900
        %v1088 = vunpack.c.l.b16 %v901
        %v1089 = vunpack.c.h.b16 %v901
        %v1090 = vunpack.c.l.b16 %v902
        %v1091 = vunpack.c.h.b16 %v902
        %v1092 = vunpack.c.l.b16 %v903
        %v1093 = vunpack.c.h.b16 %v903
        %v1094 = vunpack.c.l.b16 %v904
        %v1095 = vunpack.c.h.b16 %v904
        %v1096 = vunpack.c.l.b16 %v905
        %v1097 = vunpack.c.h.b16 %v905
        %v1098 = vunpack.c.l.b16 %v906
        %v1099 = vunpack.c.h.b16 %v906
        %v1100 = vunpack.c.l.b16 %v907
        %v1101 = vunpack.c.h.b16 %v907
        %v1102 = vunpack.c.l.b16 %v908
        %v1103 = vunpack.c.h.b16 %v908
        %v1104 = vunpack.c.l.b16 %v909
        %v1105 = vunpack.c.h.b16 %v909
        %v1106 = vunpack.c.l.b16 %v910
        %v1107 = vunpack.c.h.b16 %v910
        %v1108 = vunpack.c.l.b16 %v911
        %v1109 = vunpack.c.h.b16 %v911
        %v1110 = vunpack.c.l.b16 %v912
        %v1111 = vunpack.c.h.b16 %v912
        %v1112 = vunpack.c.l.b16 %v913
        %v1113 = vunpack.c.h.b16 %v913
        %v1114 = vunpack.c.l.b16 %v914
        %v1115 = vunpack.c.h.b16 %v914
        %v1116 = vunpack.c.l.b16 %v915
        %v1117 = vunpack.c.h.b16 %v915
        %v1118 = vunpack.c.l.b16 %v916
        %v1119 = vunpack.c.h.b16 %v916
        %v1120 = vunpack.c.l.b16 %v917
        %v1121 = vunpack.c.h.b16 %v917
        %v1122 = vpack.c.b16 %v996, %v994
        %v1123 = vpack.c.b16 %v997, %v995
        %v1124 = vpack.c.b16 %v1000, %v998
        %v1125 = vpack.c.b16 %v1001, %v999
        %v1126 = vpack.c.b16 %v1004, %v1002
        %v1127 = vpack.c.b16 %v1005, %v1003
        %v1128 = vpack.c.b16 %v1008, %v1006
        %v1129 = vpack.c.b16 %v1009, %v1007
        %v1130 = vpack.c.b16 %v1012, %v1010
        %v1131 = vpack.c.b16 %v1013, %v1011
        %v1132 = vpack.c.b16 %v1016, %v1014
        %v1133 = vpack.c.b16 %v1017, %v1015
        %v1134 = vpack.c.b16 %v1020, %v1018
        %v1135 = vpack.c.b16 %v1021, %v1019
        %v1136 = vpack.c.b16 %v1024, %v1022
        %v1137 = vpack.c.b16 %v1025, %v1023
        %v1138 = vpack.c.b16 %v1028, %v1026
        %v1139 = vpack.c.b16 %v1029, %v1027
        %v1140 = vpack.c.b16 %v1032, %v1030
        %v1141 = vpack.c.b16 %v1033, %v1031
        %v1142 = vpack.c.b16 %v1036, %v1034
        %v1143 = vpack.c.b16 %v1037, %v1035
        %v1144 = vpack.c.b16 %v1040, %v1038
        %v1145 = vpack.c.b16 %v1041, %v1039
        %v1146 = vpack.c.b16 %v1044, %v1042
        %v1147 = vpack.c.b16 %v1045, %v1043
        %v1148 = vpack.c.b16 %v1048, %v1046
        %v1149 = vpack.c.b16 %v1049, %v1047
        %v1150 = vpack.c.b16 %v1052, %v1050
        %v1151 = vpack.c.b16 %v1053, %v1051
        %v1152 = vpack.c.b16 %v1056, %v1054
        %v1153 = vpack.c.b16 %v1057, %v1055
        %v1154 = vpack.c.b16 %v1060, %v1058
        %v1155 = vpack.c.b16 %v1061, %v1059
        %v1156 = vpack.c.b16 %v1064, %v1062
        %v1157 = vpack.c.b16 %v1065, %v1063
        %v1158 = vpack.c.b16 %v1068, %v1066
        %v1159 = vpack.c.b16 %v1069, %v1067
        %v1160 = vpack.c.b16 %v1072, %v1070
        %v1161 = vpack.c.b16 %v1073, %v1071
        %v1162 = vpack.c.b16 %v1076, %v1074
        %v1163 = vpack.c.b16 %v1077, %v1075
        %v1164 = vpack.c.b16 %v1080, %v1078
        %v1165 = vpack.c.b16 %v1081, %v1079
        %v1166 = vpack.c.b16 %v1084, %v1082
        %v1167 = vpack.c.b16 %v1085, %v1083
        %v1168 = vpack.c.b16 %v1088, %v1086
        %v1169 = vpack.c.b16 %v1089, %v1087
        %v1170 = vpack.c.b16 %v1092, %v1090
        %v1171 = vpack.c.b16 %v1093, %v1091
        %v1172 = vpack.c.b16 %v1096, %v1094
        %v1173 = vpack.c.b16 %v1097, %v1095
        %v1174 = vpack.c.b16 %v1100, %v1098
        %v1175 = vpack.c.b16 %v1101, %v1099
        %v1176 = vpack.c.b16 %v1104, %v1102
        %v1177 = vpack.c.b16 %v1105, %v1103
        %v1178 = vpack.c.b16 %v1108, %v1106
        %v1179 = vpack.c.b16 %v1109, %v1107
        %v1180 = vpack.c.b16 %v1112, %v1110
        %v1181 = vpack.c.b16 %v1113, %v1111
        %v1182 = vpack.c.b16 %v1116, %v1114
        %v1183 = vpack.c.b16 %v1117, %v1115
        %v1184 = vpack.c.b16 %v1120, %v1118
        %v1185 = vpack.c.b16 %v1121, %v1119
        %1250 = vmatprep.subr.bf16.mxu0 %v1123
        %1251 = vmatpush1.bf16.msra.mxu0 %v1122
        %1252 = vmatprep.subr.bf16.mxu0 %v1125
        %1253 = vmatpush1.bf16.msra.mxu0 %v1124
        %1254 = vmatprep.subr.bf16.mxu0 %v1127
        %1255 = vmatpush1.bf16.msra.mxu0 %v1126
        %1256 = vmatprep.subr.bf16.mxu0 %v1129
        %1257 = vmatpush1.bf16.msra.mxu0 %v1128
        %1258 = vmatprep.subr.bf16.mxu0 %v1131
        %1259 = vmatpush1.bf16.msra.mxu0 %v1130
        %1260 = vmatprep.subr.bf16.mxu0 %v1133
        %1261 = vmatpush1.bf16.msra.mxu0 %v1132
        %1262 = vmatprep.subr.bf16.mxu0 %v1135
        %1263 = vmatpush1.bf16.msra.mxu0 %v1134
        %1264 = vmatprep.subr.bf16.mxu0 %v1137
        %1265 = vmatpush1.bf16.msra.mxu0 %v1136
        %1266 = vmatprep.subr.bf16.mxu0 %v1139
        %1267 = vmatpush1.bf16.msra.mxu0 %v1138
        %1268 = vmatprep.subr.bf16.mxu0 %v1141
        %1269 = vmatpush1.bf16.msra.mxu0 %v1140
        %1270 = vmatprep.subr.bf16.mxu0 %v1143
        %1271 = vmatpush1.bf16.msra.mxu0 %v1142
        %1272 = vmatprep.subr.bf16.mxu0 %v1145
        %1273 = vmatpush1.bf16.msra.mxu0 %v1144
        %1274 = vmatprep.subr.bf16.mxu0 %v1147
        %1275 = vmatpush1.bf16.msra.mxu0 %v1146
        %1276 = vmatprep.subr.bf16.mxu0 %v1149
        %1277 = vmatpush1.bf16.msra.mxu0 %v1148
        %1278 = vmatprep.subr.bf16.mxu0 %v1151
        %1279 = vmatpush1.bf16.msra.mxu0 %v1150
        %1280 = vmatprep.subr.bf16.mxu0 %v1153
        %1281 = vmatpush1.bf16.msra.mxu0 %v1152
        %1282 = vmatprep.mubr.bf16.mxu0 %v851
        %1283 = vmatmul.mubr.bf16.gmra.mrb[0].mxu0 %v850
        %v1284 = vpop.f32.mrb[0].mxu0
        %v1285 = vadd.f32 %v923, %v1284
        %v1286 = vpop.f32.mrb[0].mxu0
        %v1287 = vadd.f32 %v927, %v1286
        %v1288 = vpop.f32.mrb[0].mxu0
        %v1289 = vadd.f32 %v923, %v1288
        %v1290 = vpop.f32.mrb[0].mxu0
        %v1291 = vadd.f32 %v927, %v1290
        %1292 = vdwg.mxu0
        %1293 = vmatprep.subr.bf16.mxu0 %v1155
        %1294 = vmatpush1.bf16.msra.mxu0 %v1154
        %1295 = vmatprep.subr.bf16.mxu0 %v1157
        %1296 = vmatpush1.bf16.msra.mxu0 %v1156
        %1297 = vmatprep.subr.bf16.mxu0 %v1159
        %1298 = vmatpush1.bf16.msra.mxu0 %v1158
        %1299 = vmatprep.subr.bf16.mxu0 %v1161
        %1300 = vmatpush1.bf16.msra.mxu0 %v1160
        %1301 = vmatprep.subr.bf16.mxu0 %v1163
        %1302 = vmatpush1.bf16.msra.mxu0 %v1162
        %1303 = vmatprep.subr.bf16.mxu0 %v1165
        %1304 = vmatpush1.bf16.msra.mxu0 %v1164
        %1305 = vmatprep.subr.bf16.mxu0 %v1167
        %1306 = vmatpush1.bf16.msra.mxu0 %v1166
        %1307 = vmatprep.subr.bf16.mxu0 %v1169
        %1308 = vmatpush1.bf16.msra.mxu0 %v1168
        %1309 = vmatprep.subr.bf16.mxu0 %v1171
        %1310 = vmatpush1.bf16.msra.mxu0 %v1170
        %1311 = vmatprep.subr.bf16.mxu0 %v1173
        %1312 = vmatpush1.bf16.msra.mxu0 %v1172
        %1313 = vmatprep.subr.bf16.mxu0 %v1175
        %1314 = vmatpush1.bf16.msra.mxu0 %v1174
        %1315 = vmatprep.subr.bf16.mxu0 %v1177
        %1316 = vmatpush1.bf16.msra.mxu0 %v1176
        %1317 = vmatprep.subr.bf16.mxu0 %v1179
        %1318 = vmatpush1.bf16.msra.mxu0 %v1178
        %1319 = vmatprep.subr.bf16.mxu0 %v1181
        %1320 = vmatpush1.bf16.msra.mxu0 %v1180
        %1321 = vmatprep.subr.bf16.mxu0 %v1183
        %1322 = vmatpush1.bf16.msra.mxu0 %v1182
        %1323 = vmatprep.subr.bf16.mxu0 %v1185
        %1324 = vmatpush1.bf16.msra.mxu0 %v1184
        %1325 = vmatprep.mubr.bf16.mxu0 %v853
        %1326 = vmatmul.mubr.bf16.gmra.mrb[0].mxu0 %v852
        %v1327 = vpop.f32.mrb[0].mxu0
        %v1328 = vadd.f32 %v1285, %v1327
        %v1329 = vpop.f32.mrb[0].mxu0
        %v1330 = vadd.f32 %v1287, %v1329
        %v1331 = vpop.f32.mrb[0].mxu0
        %v1332 = vadd.f32 %v1289, %v1331
        %v1333 = vpop.f32.mrb[0].mxu0
        %v1334 = vadd.f32 %v1291, %v1333
        %1335 = vdwg.mxu0
        %vm1336 = vcmp.gt.f32.partialorder %v1328, 0.0
        %vm1337 = vcmp.gt.f32.partialorder %v1330, 0.0
        %vm1338 = vcmp.gt.f32.partialorder %v1332, 0.0
        %vm1339 = vcmp.gt.f32.partialorder %v1334, 0.0
        %v1340 = vmul.f32 %v1328, 0.2
        %v1341 = vmul.f32 %v1330, 0.2
        %v1342 = vmul.f32 %v1332, 0.2
        %v1343 = vmul.f32 %v1334, 0.2
        %v1344 = vsel %vm1336, %v1328, %v1340
        %v1345 = vsel %vm1337, %v1330, %v1341
        %v1346 = vsel %vm1338, %v1332, %v1342
        %v1347 = vsel %vm1339, %v1334, %v1343
        %v1348 = vld [vmem:[%s5] sm:$0x3]
        %v1350 = vlaneseq
        %v1351 = vshrl.u32 %v1350, 7
        %v1352 = vsub.s32 0, %v1351
        %v1353 = vrot.slane %v1348, %v1352
        %v1354 = vlaneseq
        %v1355 = vshrl.u32 %v1354, 7
        %v1356 = vsub.s32 1, %v1355
        %v1357 = vrot.slane %v1348, %v1356
        %v1360 = vmul.f32 %v1344, %v1353
        %v1361 = vmul.f32 %v1345, %v1357
        %v1362 = vmul.f32 %v1346, %v1353
        %v1363 = vmul.f32 %v1347, %v1357
        %v1364 = vadd.f32 %v1360, %v1361
        %1365 = vadd.xlane.f32.xlu0 %v1364
        %v1366 = vpop.xlane.xlu0 %1365
        %v1367 = vadd.f32 %v1362, %v1363
        %1368 = vadd.xlane.f32.xlu0 %v1367
        %v1369 = vpop.xlane.xlu0 %1368
        %s1370 = sld [smem:[#allocation2]]
        %v1371 = vstv %s1370
        %v1372 = vadd.f32 %v1366, %v1371
        %v1373 = vadd.f32 %v1369, %v1371
        %v1376 = vlaneseq
        %v1377 = vand.u32 %v1376, 127
        %v1378 = vlaneseq
        %v1379 = vshrl.u32 %v1378, 7
        %v1380 = vsub.s32 %v1377, %v1379
        %v1381 = vrot.slane %v1372, %v1380
        %v1382 = vadd.s32 %v1377, 4294967288
        %v1383 = vlaneseq
        %v1384 = vshrl.u32 %v1383, 7
        %v1385 = vsub.s32 %v1382, %v1384
        %v1386 = vrot.slane %v1373, %v1385
        %vm1387 = vcmask 130112
        %v1388 = vsel %vm1387, %v1386, %v1381
        %vm1390 = vcmask 122880
        %1391 = vst.msk [vmem:[%s326] sm:$0x1] %vm1390, %v1388
        %s1392 = sand.u32 %s186, 1
        %s1393 = scalar_lea.sflag [#allocation5], %s1392
        %s1394 = sand.u32 %s186, 1
        %s1395 = scalar_lea.vmem [#allocation9], %s1394
        // Predicated region
        $region61: #{tpu_custom_call.1} parent=47 // pred_check
          %p1396 = pneg %p196
        $region62: #{tpu_custom_call.1} parent=47 // pred_check_branch
          %1398 = sbr.rel (%p1396) target = $region64
        $region63: #{tpu_custom_call.1} parent=47 // pred_region
          %s1400 = ssub.s32 16, 16
          %1401 = vsyncadd %s1393, %s1400
          %s1402 = smul.addr %s26, 16
          %s1403 = scalar_lea.hbm %s7, %s1402
          %s1405 = sshll.u32 %s1395, 4
          %s1406 = int_to_ptr.vmem [resolvable:$true] %s1405
          %1408 = dma.vmem_to_hbm [thread:$0]  %s1406, 16, %s1403, %s1393
        $region64: #{tpu_custom_call.1} parent=47 // pred_fallthru
          _
      $region48: #{tpu_custom_call.1} parent=5 // pred_fallthru
        _
      %p1409 = scmp.le.s32.totalorder 2, %s21
      // Predicated region
      $region65: #{tpu_custom_call.1} parent=5 // pred_check
        %p1410 = pneg %p1409
      $region66: #{tpu_custom_call.1} parent=5 // pred_check_branch
        %1412 = sbr.rel (%p1410) target = $region68
      $region67: #{tpu_custom_call.1} parent=5 // pred_region
        %s1413 = ssub.s32 %s21, 2
        // Predicated region
        $region69: #{tpu_custom_call.1} parent=67 // pred_check
          %p1414 = pneg %p202
        $region70: #{tpu_custom_call.1} parent=67 // pred_check_branch
          %1416 = sbr.rel (%p1414) target = $region72
        $region71: #{tpu_custom_call.1} parent=67 // pred_region
          %s1417 = sand.u32 %s187, 1
          %s1418 = scalar_lea.sflag [#allocation5], %s1417
          %s1419 = sand.u32 %s187, 1
          %s1420 = scalar_lea.vmem [#allocation9], %s1419
          %1421 = dma.done %s1418, 16
        $region72: #{tpu_custom_call.1} parent=67 // pred_fallthru
          _
      $region68: #{tpu_custom_call.1} parent=5 // pred_fallthru
        _
    $region6: #{tpu_custom_call.1} parent=1 // loop_footer
      %s25 = sadd.s32 1, %s21
    $region7: #{tpu_custom_call.1} parent=1 // loop_footer_branch
      %20 = sbr.rel target = $region3
    $region8: #{tpu_custom_call.1} parent=1 // loop_exit
      _
    %1422 = vsyncpa [#allocation4], 1
    %s1423 = scalar_lea.sflag [#allocation4], 1
    %1424 = vsyncpa %s1423, 1
    %1425 = vsyncpa [#allocation7], 1
    %1426 = vsyncpa [#allocation5], 1
    %s1427 = scalar_lea.sflag [#allocation5], 1
    %1428 = vsyncpa %s1427, 1

</llo_original>
